<compile_context>
chip_gen: v7x
topology: tpu7x:2x2x1
jax: 0.10.0
libtpu: 0.0.40
codegen_flags: <defaults>
</compile_context>

<pallas_src>
import functools

import jax
import jax.numpy as jnp
from jax.experimental import pallas as pl
from jax.experimental.pallas import tpu as pltpu

BN_EPS = 1e-5
_LANE = 128


def residual_mlp_kernel(x_ref, w_ref, p_ref, o_ref):
    # x_ref : (N, D_in)      full batch (BN needs the whole batch per feature)
    # w_ref : (D_in, 2*tn)   [W_fc tile | W_ds tile] concatenated along lanes (bf16)
    # p_ref : (4, tn)        rows = [b_fc, gamma, beta, b_ds] (f32)
    # o_ref : (N, tn)        f32
    tn = o_ref.shape[1]

    # ---- single MXU pass for both the fc and the downsample projections ----
    # bf16 x bf16 operands, f32 accumulation (native MXU path on v5e/v6e/v7x).
    x = x_ref[...].astype(w_ref.dtype)
    out_cat = jnp.dot(x, w_ref[...], preferred_element_type=jnp.float32)

    out = out_cat[:, :tn] + p_ref[0:1, :]        # fc + b_fc
    identity = out_cat[:, tn:] + p_ref[3:4, :]   # downsample + b_ds

    # ---- BatchNorm1d, training-mode forward (biased batch stats over axis 0) ----
    mean = jnp.mean(out, axis=0, keepdims=True)
    ctr = out - mean
    var = jnp.mean(ctr * ctr, axis=0, keepdims=True)
    scale = p_ref[1:2, :] * jax.lax.rsqrt(var + BN_EPS)   # gamma folded into rsqrt
    out = ctr * scale + p_ref[2:3, :]                     # + beta

    # ---- ReLU; Dropout(p=0) is identity ----
    out = jnp.maximum(out, 0.0)

    o_ref[...] = (identity + out).astype(o_ref.dtype)


def _vmem_need_bytes(n, d_in, tile_n, w_itemsize):
    w = 2 * d_in * (2 * tile_n) * w_itemsize   # double-buffered fused weight tile
    xb = n * d_in * 4                          # x, single-buffered (constant block)
    pb = 2 * 4 * tile_n * 4                    # packed per-feature vectors
    ob = 2 * n * tile_n * 4                    # double-buffered f32 output tile
    return w + xb + pb + ob


def choose_tiling(n, d_in, d_out, *, w_itemsize=2, budget_bytes=24 << 20, max_tile=1024):
    """Pick tile_n from a VMEM budget (d_in/N aware), lane-dense, >=2 tiles preferred."""
    d_out_p = _LANE * pl.cdiv(d_out, _LANE)      # pad feature axis to lane width
    cands = [t for t in range(_LANE, min(d_out_p, max_tile) + 1, _LANE)
             if d_out_p % t == 0]
    fitting = [t for t in cands
               if _vmem_need_bytes(n, d_in, t, w_itemsize) <= budget_bytes]
    if not fitting:
        # TODO(synk): for very large d_in, add an inner "arbitrary" K grid axis with an
        # f32 VMEM accumulator instead of shrinking tile_n below lane-dense sizes.
        fitting = [cands[0]]
    # Prefer >=2 tiles: shards the "parallel" axis across both v7x TensorCores and
    # lets the weight DMA for step j+1 overlap compute/writeback of step j on v5e/v6e.
    multi = [t for t in fitting if d_out_p // t >= 2]
    tile_n = max(multi) if multi else max(fitting)
    need = _vmem_need_bytes(n, d_in, tile_n, w_itemsize)
    vmem_limit = int(min(max(32 << 20, need + (8 << 20)), 64 << 20))
    return tile_n, d_out_p, vmem_limit


def pack_params(w_fc, b_fc, gamma, beta, w_ds, b_ds, *, tile_n, d_out_p,
                weight_dtype=jnp.bfloat16):
    """Pack weights / per-feature vectors ONCE at init time (never per forward call)."""
    d_in, d_out = w_fc.shape
    pad = d_out_p - d_out

    def padv(v):
        v = v.reshape(1, d_out)
        return jnp.pad(v, ((0, 0), (0, pad))) if pad else v

    if pad:
        w_fc = jnp.pad(w_fc, ((0, 0), (0, pad)))
        w_ds = jnp.pad(w_ds, ((0, 0), (0, pad)))

    n_tiles = d_out_p // tile_n
    # Output tile j sees [W_fc_tile_j | W_ds_tile_j] as one contiguous (d_in, 2*tile_n)
    # block -> a single fused MXU pass per grid step.
    w_cat = jnp.concatenate(
        [w_fc.reshape(d_in, n_tiles, tile_n),
         w_ds.reshape(d_in, n_tiles, tile_n)],
        axis=2).reshape(d_in, 2 * d_out_p).astype(weight_dtype)

    params = jnp.concatenate(
        [padv(b_fc), padv(gamma), padv(beta), padv(b_ds)], axis=0
    ).astype(jnp.float32)
    return w_cat, params


@functools.partial(jax.jit, static_argnames=("tile_n", "d_out", "vmem_limit_bytes"))
def residual_mlp_block(x, w_cat, params, *, tile_n, d_out, vmem_limit_bytes=32 << 20):
    n, d_in = x.shape
    d_out_p = params.shape[1]
    n_tiles = d_out_p // tile_n

    cost = pl.CostEstimate(
        flops=2 * n * d_in * 2 * d_out_p,
        transcendentals=0,
        bytes_accessed=(x.size * x.dtype.itemsize
                        + w_cat.size * w_cat.dtype.itemsize
                        + params.size * params.dtype.itemsize
                        + n * d_out_p * 4),
    )

    out = pl.pallas_call(
        residual_mlp_kernel,
        out_shape=jax.ShapeDtypeStruct((n, d_out_p), jnp.float32),
        grid_spec=pltpu.PrefetchScalarGridSpec(
            num_scalar_prefetch=0,
            grid=(n_tiles,),
            in_specs=[
                # x block never changes across grid steps: single buffer, no re-DMA.
                pl.BlockSpec((n, d_in), lambda j: (0, 0),
                             pipeline_mode=pl.Buffered(1)),
                pl.BlockSpec((d_in, 2 * tile_n), lambda j: (0, j)),   # [W_fc|W_ds] tile
                pl.BlockSpec((4, tile_n), lambda j: (0, j)),          # packed vectors
            ],
            out_specs=pl.BlockSpec((n, tile_n), lambda j: (0, j)),
        ),
        compiler_params=pltpu.CompilerParams(
            dimension_semantics=("parallel",),
            vmem_limit_bytes=vmem_limit_bytes),
        cost_estimate=cost,
    )(x, w_cat, params)

    return out if d_out_p == d_out else out[:, :d_out]


def reference(x, w_fc, b_fc, gamma, beta, w_ds, b_ds, weight_dtype=jnp.bfloat16):
    # Matches the kernel's numerics: bf16 operands, f32 accumulation.
    xw = x.astype(weight_dtype)
    out = jnp.dot(xw, w_fc.astype(weight_dtype),
                  preferred_element_type=jnp.float32) + b_fc
    mean = out.mean(axis=0, keepdims=True)
    var = ((out - mean) ** 2).mean(axis=0, keepdims=True)
    out = (out - mean) / jnp.sqrt(var + BN_EPS) * gamma + beta
    out = jnp.maximum(out, 0.0)
    identity = jnp.dot(xw, w_ds.astype(weight_dtype),
                       preferred_element_type=jnp.float32) + b_ds
    return identity + out


if __name__ == "__main__":
    # Small shapes: batch=8, input_dim=32, output_dim=256 (downsample path active).
    N, D_IN, D_OUT = 8, 32, 256

    key = jax.random.PRNGKey(0)
    kx, kw1, kb1, kw2, kb2 = jax.random.split(key, 5)

    x = jax.random.normal(kx, (N, D_IN), dtype=jnp.float32)

    # Deterministic parameter init (PyTorch-Linear-style uniform, stored transposed [D_in, D_out]).
    bound = 1.0 / (D_IN ** 0.5)
    w_fc = jax.random.uniform(kw1, (D_IN, D_OUT), minval=-bound, maxval=bound, dtype=jnp.float32)
    b_fc = jax.random.uniform(kb1, (1, D_OUT), minval=-bound, maxval=bound, dtype=jnp.float32)
    w_ds = jax.random.uniform(kw2, (D_IN, D_OUT), minval=-bound, maxval=bound, dtype=jnp.float32)
    b_ds = jax.random.uniform(kb2, (1, D_OUT), minval=-bound, maxval=bound, dtype=jnp.float32)
    gamma = jnp.ones((1, D_OUT), dtype=jnp.float32)   # BatchNorm1d weight
    beta = jnp.zeros((1, D_OUT), dtype=jnp.float32)   # BatchNorm1d bias

    # ---- one-time init: derive tiling from the VMEM budget and pack the weights ----
    tile_n, d_out_p, vmem_limit = choose_tiling(N, D_IN, D_OUT, w_itemsize=2)
    w_cat, params = pack_params(w_fc, b_fc, gamma, beta, w_ds, b_ds,
                                tile_n=tile_n, d_out_p=d_out_p,
                                weight_dtype=jnp.bfloat16)
    w_cat, params = jax.block_until_ready((w_cat, params))

    # ---- forward call: only x and the pre-packed arrays cross the jit boundary ----
    y = residual_mlp_block(x, w_cat, params, tile_n=tile_n, d_out=D_OUT,
                           vmem_limit_bytes=vmem_limit)
    y = jax.block_until_ready(y)

    y_ref = reference(x, w_fc, b_fc, gamma, beta, w_ds, b_ds)
    assert y.shape == (N, D_OUT)
    assert jnp.allclose(y, y_ref, atol=1e-3, rtol=1e-3), "mismatch vs JAX reference"

    # TODO(synk): PyTorch BatchNorm1d train mode also updates running_mean/running_var
    # (module side effect); only the forward activation is produced here.
    print("KERNEL_OK")
</pallas_src>

<mosaic_0001>
module attributes {stable_mosaic.version = 11 : i64} {
  func.func @residual_mlp_kernel(%arg0: i32, %arg1: memref<8x32xf32, #tpu.memory_space<vmem>>, %arg2: memref<32x256xbf16, #tpu.memory_space<vmem>>, %arg3: memref<4x128xf32, #tpu.memory_space<vmem>>, %arg4: memref<8x128xf32, #tpu.memory_space<vmem>>) attributes {dimension_semantics = [#tpu.dimension_semantics<parallel>], iteration_bounds = array<i64: 2>, scalar_prefetch = 0 : i64, scratch_operands = 0 : i64, tpu.core_type = #tpu.core_type<tc>, window_params = [{pipeline_mode = #tpu.pipeline_mode<synchronous>, transform_indices = @transform_0, window_bounds = array<i64: 8, 32>}, {transform_indices = @transform_1, window_bounds = array<i64: 32, 256>}, {transform_indices = @transform_2, window_bounds = array<i64: 4, 128>}, {transform_indices = @transform_3, window_bounds = array<i64: 8, 128>}]} {
    %c0 = arith.constant 0 : index
    %c0_0 = arith.constant 0 : index
    %0 = vector.load %arg1[%c0, %c0_0] : memref<8x32xf32, #tpu.memory_space<vmem>>, vector<8x32xf32>
    %1 = arith.truncf %0 : vector<8x32xf32> to vector<8x32xbf16>
    %c0_1 = arith.constant 0 : index
    %c0_2 = arith.constant 0 : index
    %2 = vector.load %arg2[%c0_1, %c0_2] : memref<32x256xbf16, #tpu.memory_space<vmem>>, vector<32x256xbf16>
    %cst = arith.constant dense<0.000000e+00> : vector<8x256xf32>
    %3 = tpu.matmul %1, %2, %cst {dimension_numbers = #tpu.dot_dimension_numbers<[1], [0], [0], [1], [0, 0, 1, 1], [], []>} : vector<8x32xbf16>, vector<32x256xbf16>, vector<8x256xf32> -> vector<8x256xf32>
    %4 = vector.extract_strided_slice %3 {offsets = [0, 0], sizes = [8, 128], strides = [1, 1]} : vector<8x256xf32> to vector<8x128xf32>
    %c0_3 = arith.constant 0 : index
    %c0_4 = arith.constant 0 : index
    %5 = vector.load %arg3[%c0_3, %c0_4] : memref<4x128xf32, #tpu.memory_space<vmem>>, vector<1x128xf32>
    %6 = vector.broadcast %5 : vector<1x128xf32> to vector<8x128xf32>
    %7 = arith.addf %4, %6 : vector<8x128xf32>
    %8 = vector.extract_strided_slice %3 {offsets = [0, 128], sizes = [8, 128], strides = [1, 1]} : vector<8x256xf32> to vector<8x128xf32>
    %c3 = arith.constant 3 : index
    %c0_5 = arith.constant 0 : index
    %9 = vector.load %arg3[%c3, %c0_5] : memref<4x128xf32, #tpu.memory_space<vmem>>, vector<1x128xf32>
    %10 = vector.broadcast %9 : vector<1x128xf32> to vector<8x128xf32>
    %11 = arith.addf %8, %10 : vector<8x128xf32>
    %cst_6 = arith.constant dense<0.000000e+00> : vector<128xf32>
    %12 = vector.multi_reduction <add>, %7, %cst_6 [0] : vector<8x128xf32> to vector<128xf32>
    %13 = vector.shape_cast %12 : vector<128xf32> to vector<1x128xf32>
    %cst_7 = arith.constant 8.000000e+00 : f32
    %14 = vector.broadcast %cst_7 : f32 to vector<1x128xf32>
    %15 = arith.divf %13, %14 : vector<1x128xf32>
    %16 = vector.broadcast %15 : vector<1x128xf32> to vector<8x128xf32>
    %17 = arith.subf %7, %16 : vector<8x128xf32>
    %18 = arith.mulf %17, %17 : vector<8x128xf32>
    %cst_8 = arith.constant dense<0.000000e+00> : vector<128xf32>
    %19 = vector.multi_reduction <add>, %18, %cst_8 [0] : vector<8x128xf32> to vector<128xf32>
    %20 = vector.shape_cast %19 : vector<128xf32> to vector<1x128xf32>
    %cst_9 = arith.constant 8.000000e+00 : f32
    %21 = vector.broadcast %cst_9 : f32 to vector<1x128xf32>
    %22 = arith.divf %20, %21 : vector<1x128xf32>
    %c1 = arith.constant 1 : index
    %c0_10 = arith.constant 0 : index
    %23 = vector.load %arg3[%c1, %c0_10] : memref<4x128xf32, #tpu.memory_space<vmem>>, vector<1x128xf32>
    %cst_11 = arith.constant 9.99999974E-6 : f32
    %24 = vector.broadcast %cst_11 : f32 to vector<1x128xf32>
    %25 = arith.addf %22, %24 : vector<1x128xf32>
    %26 = math.rsqrt %25 : vector<1x128xf32>
    %27 = arith.mulf %23, %26 : vector<1x128xf32>
    %28 = vector.broadcast %27 : vector<1x128xf32> to vector<8x128xf32>
    %29 = arith.mulf %17, %28 : vector<8x128xf32>
    %c2 = arith.constant 2 : index
    %c0_12 = arith.constant 0 : index
    %30 = vector.load %arg3[%c2, %c0_12] : memref<4x128xf32, #tpu.memory_space<vmem>>, vector<1x128xf32>
    %31 = vector.broadcast %30 : vector<1x128xf32> to vector<8x128xf32>
    %32 = arith.addf %29, %31 : vector<8x128xf32>
    %cst_13 = arith.constant 0.000000e+00 : f32
    %33 = vector.broadcast %cst_13 : f32 to vector<8x128xf32>
    %34 = arith.maximumf %32, %33 : vector<8x128xf32>
    %35 = arith.addf %11, %34 : vector<8x128xf32>
    %c0_14 = arith.constant 0 : index
    %c0_15 = arith.constant 0 : index
    %36 = vector.load %arg4[%c0_14, %c0_15] : memref<8x128xf32, #tpu.memory_space<vmem>>, vector<8x128xf32>
    tpu.vector_store %arg4[%c0_14, %c0_15], %35 {strides = array<i32>} : memref<8x128xf32, #tpu.memory_space<vmem>>, vector<8x128xf32>,
    return
  }
  func.func @transform_0(%arg0: i32) -> (i32, i32) {
    %c0_i32 = arith.constant 0 : i32
    %c0_i32_0 = arith.constant 0 : i32
    %c0_i32_1 = arith.constant 0 : i32
    return %c0_i32, %c0_i32_0 : i32, i32
  }
  func.func @transform_1(%arg0: i32) -> (i32, i32) {
    %c0_i32 = arith.constant 0 : i32
    %c0_i32_0 = arith.constant 0 : i32
    return %c0_i32, %arg0 : i32, i32
  }
  func.func @transform_2(%arg0: i32) -> (i32, i32) {
    %c0_i32 = arith.constant 0 : i32
    %c0_i32_0 = arith.constant 0 : i32
    return %c0_i32, %arg0 : i32, i32
  }
  func.func @transform_3(%arg0: i32) -> (i32, i32) {
    %c0_i32 = arith.constant 0 : i32
    %c0_i32_0 = arith.constant 0 : i32
    return %c0_i32, %arg0 : i32, i32
  }
}

</mosaic_0001>

<llo_original>
// kernel: residual_mlp_block.1
$region0: #{residual_mlp_block.1}
  #allocation0 [shape = 'u32[]', space=smem, size = 0x4, offset = 0x4, fixed_abs, tag = 'smem constant byte address 0x4 - core index']
  #allocation1 [shape = 'u32[144,128]{1,0:T(1,128)}', space=vmem, size = 0x12000, scoped, tag = 'internal scratch']
  %s0 = inlined_call_operand.hbm [shape: f32[8,32], index: 0, kind: input, shape index: {}]
  %s1 = inlined_call_operand.hbm [shape: bf16[32,512], index: 1, kind: input, shape index: {}]
  %s2 = inlined_call_operand.hbm [shape: f32[4,256], index: 2, kind: input, shape index: {}]
  %s3 = inlined_call_operand.hbm [shape: f32[8,256], index: 3, kind: output, shape index: {}]
  %s4 = sld [smem:[#allocation0]]
  $region57: #{residual_mlp_block.1} parent=0
    _
  %s6 = ssub.s32 1, %s4
  %s7 = scalar_select 0, %s6, %s4
  $region1: #{residual_mlp_block.1} parent=0
    #allocation2 [shape = 'u8[4096]{0}', space=vmem, size = 0x1000, scoped, tag = 'input window, operand 0, single buffered']
    #allocation3 [shape = 's32[2]{0}', space=sflag, size = 0x8, scoped, tag = 'scoped memory for residual_mlp_block.1']
    #allocation4 [shape = 's32[2]{0}', space=sflag, size = 0x8, scoped, tag = 'scoped memory for residual_mlp_block.1']
    #allocation5 [shape = 'u8[32768]{0}', space=vmem, size = 0x8000, scoped, tag = 'input window, operand 1']
    #allocation6 [shape = 's32[2]{0}', space=sflag, size = 0x8, scoped, tag = 'scoped memory for residual_mlp_block.1']
    #allocation7 [shape = 'u8[4096]{0}', space=vmem, size = 0x1000, scoped, tag = 'input window, operand 2']
    #allocation8 [shape = 'u8[8192]{0}', space=vmem, size = 0x2000, scoped, tag = 'output window, operand 0']
    %8 = vsyncpa [#allocation3], 0
    %9 = vsyncpa [#allocation6], 0
    %s10 = scalar_lea.sflag [#allocation6], 1
    %11 = vsyncpa %s10, 0
    %12 = vsyncpa [#allocation4], 0
    %s13 = scalar_lea.sflag [#allocation4], 1
    %14 = vsyncpa %s13, 0
    loop: start=0, step=1, limit=4
    $region2: #{residual_mlp_block.1} parent=1 // loop_pre_header
      _
    $region3: #{residual_mlp_block.1} parent=1 // loop_header
      %s16 = sphi 0, %s20
      %p17 = scmp.ge.s32.totalorder %s16, 4
      %s24 = sphi 0, %s24
      %s26 = sphi 0, %s24
      %s27 = sphi 0, %s26
      %s41 = sphi 0, %s27
      %s47 = sphi 0, %s49
      %s50 = sphi 0, %s47
      %s51 = sphi 0, %s50
      %s67 = sphi 0, %s51
      %s73 = sphi 0, %s75
      %s76 = sphi 0, %s73
      %s77 = sphi 0, %s76
      %s93 = sphi 0, %s77
      %s99 = sphi 0, %s101
      %s102 = sphi 0, %s99
      %s103 = sphi 0, %s102
      %s119 = sphi 0, %s103
    $region4: #{residual_mlp_block.1} parent=1 // loop_header_branch
      %19 = sbr.rel (%p17) target = $region8
    $region5: #{residual_mlp_block.1} parent=1 // loop_body
      %s21 = ssub.s32 %s16, 1
      %s22 = ssub.s32 %s16, 2
      %s23 = sadd.s32 %s16, 1
      %s25 = sadd.s32 %s24, 1
      %p28 = scmp.eq.s32.totalorder %s16, 1
      %p29 = scmp.ne.s32.totalorder %s24, %s26
      %p30 = scmp.eq.s32.totalorder %s16, 0
      %p31 = por %p29, %p30
      %p32 = scmp.ne.s32.totalorder %s24, %s26
      %p33 = scmp.eq.s32.totalorder %s21, 1
      %p34 = por %p32, %p33
      %p35 = scmp.ne.s32.totalorder %s26, %s27
      %p36 = scmp.eq.s32.totalorder %s21, 0
      %p37 = por %p35, %p36
      %p38 = scmp.ne.s32.totalorder %s26, %s27
      %p39 = scmp.eq.s32.totalorder %s22, 1
      %p40 = por %p38, %p39
      %p42 = scmp.ne.s32.totalorder %s27, %s41
      %p43 = scmp.eq.s32.totalorder %s22, 0
      %p44 = por %p42, %p43
      %s45 = ssub.s32 %s16, %s23
      %p46 = scmp.eq.s32.totalorder %s45, 0
      %s48 = sadd.s32 %s47, 1
      %s49 = scalar_select %p46, %s47, %s48
      %p52 = pneg %p46
      %p53 = scmp.eq.s32.totalorder %s16, 1
      %p54 = por %p52, %p53
      %p55 = scmp.ne.s32.totalorder %s47, %s50
      %p56 = scmp.eq.s32.totalorder %s16, 0
      %p57 = por %p55, %p56
      %p58 = scmp.ne.s32.totalorder %s47, %s50
      %p59 = scmp.eq.s32.totalorder %s21, 1
      %p60 = por %p58, %p59
      %p61 = scmp.ne.s32.totalorder %s50, %s51
      %p62 = scmp.eq.s32.totalorder %s21, 0
      %p63 = por %p61, %p62
      %p64 = scmp.ne.s32.totalorder %s50, %s51
      %p65 = scmp.eq.s32.totalorder %s22, 1
      %p66 = por %p64, %p65
      %p68 = scmp.ne.s32.totalorder %s51, %s67
      %p69 = scmp.eq.s32.totalorder %s22, 0
      %p70 = por %p68, %p69
      %s71 = ssub.s32 %s16, %s23
      %p72 = scmp.eq.s32.totalorder %s71, 0
      %s74 = sadd.s32 %s73, 1
      %s75 = scalar_select %p72, %s73, %s74
      %p78 = pneg %p72
      %p79 = scmp.eq.s32.totalorder %s16, 1
      %p80 = por %p78, %p79
      %p81 = scmp.ne.s32.totalorder %s73, %s76
      %p82 = scmp.eq.s32.totalorder %s16, 0
      %p83 = por %p81, %p82
      %p84 = scmp.ne.s32.totalorder %s73, %s76
      %p85 = scmp.eq.s32.totalorder %s21, 1
      %p86 = por %p84, %p85
      %p87 = scmp.ne.s32.totalorder %s76, %s77
      %p88 = scmp.eq.s32.totalorder %s21, 0
      %p89 = por %p87, %p88
      %p90 = scmp.ne.s32.totalorder %s76, %s77
      %p91 = scmp.eq.s32.totalorder %s22, 1
      %p92 = por %p90, %p91
      %p94 = scmp.ne.s32.totalorder %s77, %s93
      %p95 = scmp.eq.s32.totalorder %s22, 0
      %p96 = por %p94, %p95
      %s97 = ssub.s32 %s16, %s23
      %p98 = scmp.eq.s32.totalorder %s97, 0
      %s100 = sadd.s32 %s99, 1
      %s101 = scalar_select %p98, %s99, %s100
      %p104 = pneg %p98
      %p105 = scmp.eq.s32.totalorder %s16, 1
      %p106 = por %p104, %p105
      %p107 = scmp.ne.s32.totalorder %s99, %s102
      %p108 = scmp.eq.s32.totalorder %s16, 0
      %p109 = por %p107, %p108
      %p110 = scmp.ne.s32.totalorder %s99, %s102
      %p111 = scmp.eq.s32.totalorder %s21, 1
      %p112 = por %p110, %p111
      %p113 = scmp.ne.s32.totalorder %s102, %s103
      %p114 = scmp.eq.s32.totalorder %s21, 0
      %p115 = por %p113, %p114
      %p116 = scmp.ne.s32.totalorder %s102, %s103
      %p117 = scmp.eq.s32.totalorder %s22, 1
      %p118 = por %p116, %p117
      %p120 = scmp.ne.s32.totalorder %s103, %s119
      %p121 = scmp.eq.s32.totalorder %s22, 0
      %p122 = por %p120, %p121
      %p123 = scmp.le.s32.totalorder 1, %s16
      %p124 = scmp.lt.s32.totalorder %s16, 3
      %p125 = pnand %p123, %p124
      %p126 = pneg %p125
      // Predicated region
      $region9: #{residual_mlp_block.1} parent=5 // pred_check
        _
      $region10: #{residual_mlp_block.1} parent=5 // pred_check_branch
        %128 = sbr.rel (%p125) target = $region12
      $region11: #{residual_mlp_block.1} parent=5 // pred_region
        %s129 = ssub.s32 %s16, 1
        // Predicated region
        $region13: #{residual_mlp_block.1} parent=11 // pred_check
          %p130 = pneg %p37
        $region14: #{residual_mlp_block.1} parent=11 // pred_check_branch
          %132 = sbr.rel (%p130) target = $region16
        $region15: #{residual_mlp_block.1} parent=11 // pred_region
          %s134 = ssub.s32 128, 128
          %135 = vsyncadd [#allocation3], %s134
          %s137 = sshll.u32 [#allocation2], 4
          %s138 = int_to_ptr.vmem [resolvable:$true] %s137
          %140 = dma.hbm_to_vmem [thread:$0]  %s0, 128, %s138, [#allocation3]
        $region16: #{residual_mlp_block.1} parent=11 // pred_fallthru
          _
      $region12: #{residual_mlp_block.1} parent=5 // pred_fallthru
        _
      %p141 = scmp.lt.s32.totalorder %s16, 2
      // Predicated region
      $region17: #{residual_mlp_block.1} parent=5 // pred_check
        %p142 = pneg %p141
      $region18: #{residual_mlp_block.1} parent=5 // pred_check_branch
        %144 = sbr.rel (%p142) target = $region20
      $region19: #{residual_mlp_block.1} parent=5 // pred_region
        // Predicated region
        $region21: #{residual_mlp_block.1} parent=19 // pred_check
          %p145 = pneg %p57
        $region22: #{residual_mlp_block.1} parent=19 // pred_check_branch
          %147 = sbr.rel (%p145) target = $region24
        $region23: #{residual_mlp_block.1} parent=19 // pred_region
          %s148 = sand.u32 %s16, 1
          %s149 = scalar_lea.sflag [#allocation6], %s148
          %s150 = sand.u32 %s47, 1
          %s151 = smul.addr %s150, 32
          %s152 = scalar_lea.vmem [#allocation5], %s151
          %s153 = smul.u32 2, %s16
          %s155 = ssub.s32 512, 512
          %156 = vsyncadd %s149, %s155
          %s157 = smul.addr %s153, 64
          %s158 = scalar_lea.hbm %s1, %s157
          %s159 = sshll.u32 %s152, 4
          %s160 = int_to_ptr.vmem [resolvable:$true] %s159
          %165 = dma.hbm_to_vmem [thread:$0]  %s158, 512, %s160, %s149, 256, 128, 8
        $region24: #{residual_mlp_block.1} parent=19 // pred_fallthru
          _
        // Predicated region
        $region25: #{residual_mlp_block.1} parent=19 // pred_check
          %p166 = pneg %p83
        $region26: #{residual_mlp_block.1} parent=19 // pred_check_branch
          %168 = sbr.rel (%p166) target = $region28
        $region27: #{residual_mlp_block.1} parent=19 // pred_region
          %s169 = sand.u32 %s16, 1
          %s170 = scalar_lea.sflag [#allocation6], %s169
          %s171 = sand.u32 %s73, 1
          %s172 = smul.addr %s171, 4
          %s173 = scalar_lea.vmem [#allocation7], %s172
          %s175 = ssub.s32 64, 64
          %176 = vsyncadd %s170, %s175
          %s177 = smul.addr %s16, 64
          %s178 = scalar_lea.hbm %s2, %s177
          %s180 = sshll.u32 %s173, 4
          %s181 = int_to_ptr.vmem [resolvable:$true] %s180
          %183 = dma.hbm_to_vmem [thread:$0]  %s178, 64, %s181, %s170
        $region28: #{residual_mlp_block.1} parent=19 // pred_fallthru
          _
      $region20: #{residual_mlp_block.1} parent=5 // pred_fallthru
        _
      %p184 = scmp.le.s32.totalorder 1, %s16
      %p185 = scmp.lt.s32.totalorder %s16, 3
      %p186 = pnand %p184, %p185
      %p187 = pneg %p186
      // Predicated region
      $region29: #{residual_mlp_block.1} parent=5 // pred_check
        _
      $region30: #{residual_mlp_block.1} parent=5 // pred_check_branch
        %189 = sbr.rel (%p186) target = $region32
      $region31: #{residual_mlp_block.1} parent=5 // pred_region
        %s190 = ssub.s32 %s16, 1
        // Predicated region
        $region33: #{residual_mlp_block.1} parent=31 // pred_check
          %p191 = pneg %p37
        $region34: #{residual_mlp_block.1} parent=31 // pred_check_branch
          %193 = sbr.rel (%p191) target = $region36
        $region35: #{residual_mlp_block.1} parent=31 // pred_region
          %194 = dma.done [#allocation3], 128
        $region36: #{residual_mlp_block.1} parent=31 // pred_fallthru
          _
        %s195 = sand.u32 %s21, 1
        %s196 = scalar_lea.sflag [#allocation6], %s195
        %s197 = sand.u32 %s50, 1
        %s198 = smul.addr %s197, 32
        %s199 = scalar_lea.vmem [#allocation5], %s198
        // Predicated region
        $region37: #{residual_mlp_block.1} parent=31 // pred_check
          %p200 = pneg %p63
        $region38: #{residual_mlp_block.1} parent=31 // pred_check_branch
          %202 = sbr.rel (%p200) target = $region40
        $region39: #{residual_mlp_block.1} parent=31 // pred_region
          %203 = dma.done %s196, 512
        $region40: #{residual_mlp_block.1} parent=31 // pred_fallthru
          _
        %s204 = sand.u32 %s21, 1
        %s205 = scalar_lea.sflag [#allocation6], %s204
        %s206 = sand.u32 %s76, 1
        %s207 = smul.addr %s206, 4
        %s208 = scalar_lea.vmem [#allocation7], %s207
        // Predicated region
        $region41: #{residual_mlp_block.1} parent=31 // pred_check
          %p209 = pneg %p89
        $region42: #{residual_mlp_block.1} parent=31 // pred_check_branch
          %211 = sbr.rel (%p209) target = $region44
        $region43: #{residual_mlp_block.1} parent=31 // pred_region
          %212 = dma.done %s205, 64
        $region44: #{residual_mlp_block.1} parent=31 // pred_fallthru
          _
        %p213 = pneg %p37
        %p214 = pneg %p34
        %s215 = sand.u32 %s21, 1
        %s216 = scalar_lea.sflag [#allocation6], %s215
        %s217 = sand.u32 %s50, 1
        %s218 = smul.addr %s217, 32
        %s219 = scalar_lea.vmem [#allocation5], %s218
        %p220 = pneg %p63
        %p221 = pneg %p60
        %s222 = sand.u32 %s21, 1
        %s223 = scalar_lea.sflag [#allocation6], %s222
        %s224 = sand.u32 %s76, 1
        %s225 = smul.addr %s224, 4
        %s226 = scalar_lea.vmem [#allocation7], %s225
        %p227 = pneg %p89
        %p228 = pneg %p86
        %p229 = pneg %p115
        %p230 = pneg %p112
        %s231 = sand.u32 %s102, 1
        %s232 = scalar_lea.sflag [#allocation4], %s231
        %s233 = sand.u32 %s102, 1
        %s234 = smul.addr %s233, 8
        %s235 = scalar_lea.vmem [#allocation8], %s234
        %s236 = smul.u32 2, %s21
        %v238 = vld [vmem:[#allocation2] sm:$0xff]
        %v239 = vpack.c.bf16 %v238, %v238
        %v240 = vld [vmem:[%s199] sm:$0xff]
        %v241 = vld [vmem:[%s199 + $0x8] sm:$0xff]
        %v242 = vld [vmem:[%s199 + $0x10] sm:$0xff]
        %v243 = vld [vmem:[%s199 + $0x18] sm:$0xff]
        %v248 = vunpack.c.l.b16 %v240
        %v249 = vunpack.c.h.b16 %v240
        %v250 = vunpack.c.l.b16 %v241
        %v251 = vunpack.c.h.b16 %v241
        %v252 = vunpack.c.l.b16 %v242
        %v253 = vunpack.c.h.b16 %v242
        %v254 = vunpack.c.l.b16 %v243
        %v255 = vunpack.c.h.b16 %v243
        %v256 = vpack.c.b16 %v250, %v248
        %v257 = vpack.c.b16 %v251, %v249
        %v258 = vpack.c.b16 %v254, %v252
        %v259 = vpack.c.b16 %v255, %v253
        %vm264 = vcmask 261120
        %v266 = vsel %vm264, %v239, 0
        %268 = vmatprep.subr.bf16.mxu0 %v257
        %269 = vmatpush1.bf16.msra.mxu0 %v256
        %270 = vmatprep.subr.bf16.mxu0 %v259
        %271 = vmatpush1.bf16.msra.mxu0 %v258
        %272 = vmatprep.subr.bf16.mxu0 0
        %273 = vmatpush1.bf16.msra.mxu0 0
        %274 = vmatprep.subr.bf16.mxu0 0
        %275 = vmatpush1.bf16.msra.mxu0 0
        %276 = vmatprep.subr.bf16.mxu0 0
        %277 = vmatpush1.bf16.msra.mxu0 0
        %278 = vmatprep.subr.bf16.mxu0 0
        %279 = vmatpush1.bf16.msra.mxu0 0
        %280 = vmatprep.subr.bf16.mxu0 0
        %281 = vmatpush1.bf16.msra.mxu0 0
        %282 = vmatprep.subr.bf16.mxu0 0
        %283 = vmatpush1.bf16.msra.mxu0 0
        %284 = vmatprep.subr.bf16.mxu0 0
        %285 = vmatpush1.bf16.msra.mxu0 0
        %286 = vmatprep.subr.bf16.mxu0 0
        %287 = vmatpush1.bf16.msra.mxu0 0
        %288 = vmatprep.subr.bf16.mxu0 0
        %289 = vmatpush1.bf16.msra.mxu0 0
        %290 = vmatprep.subr.bf16.mxu0 0
        %291 = vmatpush1.bf16.msra.mxu0 0
        %292 = vmatprep.subr.bf16.mxu0 0
        %293 = vmatpush1.bf16.msra.mxu0 0
        %294 = vmatprep.subr.bf16.mxu0 0
        %295 = vmatpush1.bf16.msra.mxu0 0
        %296 = vmatprep.subr.bf16.mxu0 0
        %297 = vmatpush1.bf16.msra.mxu0 0
        %298 = vmatprep.subr.bf16.mxu0 0
        %299 = vmatpush1.bf16.msra.mxu0 0
        %300 = vmatprep.mubr.bf16.mxu0 0
        %301 = vmatmul.mubr.bf16.gmra.mrb[0].mxu0 %v266
        %v302 = vpop.f32.mrb[0].mxu0
        %v303 = vadd.f32 0.0, %v302
        %v304 = vpop.f32.mrb[0].mxu0
        %v305 = vadd.f32 0.0, %v304
        %v306 = vpop.f32.mrb[0].mxu0
        %v307 = vpop.f32.mrb[0].mxu0
        %308 = vdwg.mxu0
        %v309 = vld [vmem:[%s208] sm:$0x1]
        %v310 = vlaneseq
        %v311 = vshrl.u32 %v310, 7
        %v312 = vsub.s32 0, %v311
        %v313 = vrot.slane %v309, %v312
        %v314 = vadd.f32 %v303, %v313
        %v315 = vld [vmem:[%s208 + $0x3] sm:$0x1]
        %v316 = vlaneseq
        %v317 = vshrl.u32 %v316, 7
        %v318 = vsub.s32 0, %v317
        %v319 = vrot.slane %v315, %v318
        %v320 = vadd.f32 %v305, %v319
        %v321 = vrot.slane %v314, 4
        %v322 = vadd.f32 %v314, %v321
        %v323 = vrot.slane %v322, 2
        %v324 = vadd.f32 %v322, %v323
        %v325 = vrot.slane %v324, 1
        %v326 = vadd.f32 %v324, %v325
        %v327 = vrcp.pop 8.0
        %v328 = vmul.f32 %v326, %v327
        %v329 = vsub.f32 %v314, %v328
        %v330 = vmul.f32 %v329, %v329
        %v331 = vrot.slane %v330, 4
        %v332 = vadd.f32 %v330, %v331
        %v333 = vrot.slane %v332, 2
        %v334 = vadd.f32 %v332, %v333
        %v335 = vrot.slane %v334, 1
        %v336 = vadd.f32 %v334, %v335
        %v337 = vmul.f32 %v336, %v327
        %v338 = vld [vmem:[%s208 + $0x1] sm:$0x1]
        %v339 = vadd.f32 %v337, 1e-05
        %v340 = vrsqrt.pop %v339
        %v341 = vmul.f32 %v338, %v340
        %v342 = vlaneseq
        %v343 = vshrl.u32 %v342, 7
        %v344 = vsub.s32 0, %v343
        %v345 = vrot.slane %v341, %v344
        %v346 = vmul.f32 %v329, %v345
        %v347 = vld [vmem:[%s208 + $0x2] sm:$0x1]
        %v348 = vlaneseq
        %v349 = vshrl.u32 %v348, 7
        %v350 = vsub.s32 0, %v349
        %v351 = vrot.slane %v347, %v350
        %v352 = vadd.f32 %v346, %v351
        %v353 = vmax.f32 %v352, 0.0
        %v354 = vadd.f32 %v320, %v353
        %355 = vst [vmem:[%s235] sm:$0xff] %v354
        %s356 = sand.u32 %s102, 1
        %s357 = scalar_lea.sflag [#allocation4], %s356
        %s358 = sand.u32 %s102, 1
        %s359 = smul.addr %s358, 8
        %s360 = scalar_lea.vmem [#allocation8], %s359
        // Predicated region
        $region45: #{residual_mlp_block.1} parent=31 // pred_check
          %p361 = pneg %p112
        $region46: #{residual_mlp_block.1} parent=31 // pred_check_branch
          %363 = sbr.rel (%p361) target = $region48
        $region47: #{residual_mlp_block.1} parent=31 // pred_region
          %s365 = ssub.s32 128, 128
          %366 = vsyncadd %s357, %s365
          %s367 = smul.addr %s21, 128
          %s368 = scalar_lea.hbm %s3, %s367
          %s370 = sshll.u32 %s360, 4
          %s371 = int_to_ptr.vmem [resolvable:$true] %s370
          %373 = dma.vmem_to_hbm [thread:$0]  %s371, 128, %s368, %s357
        $region48: #{residual_mlp_block.1} parent=31 // pred_fallthru
          _
      $region32: #{residual_mlp_block.1} parent=5 // pred_fallthru
        _
      %p374 = scmp.le.s32.totalorder 2, %s16
      // Predicated region
      $region49: #{residual_mlp_block.1} parent=5 // pred_check
        %p375 = pneg %p374
      $region50: #{residual_mlp_block.1} parent=5 // pred_check_branch
        %377 = sbr.rel (%p375) target = $region52
      $region51: #{residual_mlp_block.1} parent=5 // pred_region
        %s378 = ssub.s32 %s16, 2
        // Predicated region
        $region53: #{residual_mlp_block.1} parent=51 // pred_check
          %p379 = pneg %p118
        $region54: #{residual_mlp_block.1} parent=51 // pred_check_branch
          %381 = sbr.rel (%p379) target = $region56
        $region55: #{residual_mlp_block.1} parent=51 // pred_region
          %s382 = sand.u32 %s103, 1
          %s383 = scalar_lea.sflag [#allocation4], %s382
          %s384 = sand.u32 %s103, 1
          %s385 = smul.addr %s384, 8
          %s386 = scalar_lea.vmem [#allocation8], %s385
          %387 = dma.done %s383, 128
        $region56: #{residual_mlp_block.1} parent=51 // pred_fallthru
          _
      $region52: #{residual_mlp_block.1} parent=5 // pred_fallthru
        _
    $region6: #{residual_mlp_block.1} parent=1 // loop_footer
      %s20 = sadd.s32 1, %s16
    $region7: #{residual_mlp_block.1} parent=1 // loop_footer_branch
      %15 = sbr.rel target = $region3
    $region8: #{residual_mlp_block.1} parent=1 // loop_exit
      _
    %388 = vsyncpa [#allocation3], 1
    %s389 = scalar_lea.sflag [#allocation3], 1
    %390 = vsyncpa %s389, 1
    %391 = vsyncpa [#allocation6], 1
    %s392 = scalar_lea.sflag [#allocation6], 1
    %393 = vsyncpa %s392, 1
    %394 = vsyncpa [#allocation4], 1
    %s395 = scalar_lea.sflag [#allocation4], 1
    %396 = vsyncpa %s395, 1

</llo_original>
